<compile_context>
chip_gen: v6e
topology: v6e:2x2x1
jax: 0.10.0
libtpu: 0.0.40
codegen_flags: <defaults>
</compile_context>

<pallas_src>
import jax
import jax.numpy as jnp
from jax.experimental import pallas as pl
from jax.experimental.pallas import tpu as pltpu


def _round_up(x, m):
    return ((x + m - 1) // m) * m


# ---------------------------------------------------------------------------
# Kernels
# ---------------------------------------------------------------------------
def _proj_kernel_fullk(x_ref, w_ref, b_ref, o_ref):
    # x_ref: (tm, tk)  w_ref: (tk, tn)  b_ref: (1, tn)  o_ref: (tm, tn)
    # Single K step: write straight to the output, no scratch accumulator.
    acc = jnp.dot(x_ref[...], w_ref[...], preferred_element_type=jnp.float32)
    o_ref[...] = (acc + b_ref[...].astype(jnp.float32)).astype(o_ref.dtype)


# The single-block fast path uses the identical body (refs are the full arrays).
_proj_kernel_single = _proj_kernel_fullk


def _proj_kernel_ksplit(x_ref, w_ref, b_ref, o_ref, acc_ref):
    # x_ref: (tm, tk)  w_ref: (tk, tn)  b_ref: (1, tn)  o_ref: (tm, tn)
    # acc_ref: fp32 VMEM scratch (tm, tn); K is the trailing ("arbitrary") grid axis.
    k = pl.program_id(2)

    @pl.when(k == 0)
    def _():
        acc_ref[...] = jnp.zeros_like(acc_ref)

    acc_ref[...] += jnp.dot(x_ref[...], w_ref[...],
                            preferred_element_type=jnp.float32)

    @pl.when(k == pl.num_programs(2) - 1)
    def _():
        o_ref[...] = (acc_ref[...] + b_ref[...].astype(jnp.float32)).astype(o_ref.dtype)


# ---------------------------------------------------------------------------
# Wrapper
# ---------------------------------------------------------------------------
def image_projection(image_tokens, weight, bias, *, compute_dtype="auto",
                     tm=None, tn=None, tk=None, single_block=None):
    """image_tokens: [B, S, D]; weight: [P, D] (PyTorch nn.Linear layout); bias: [P]."""
    B, S, D = image_tokens.shape
    P, D_w = weight.shape
    assert D_w == D, "weight must be [projection_dim, dmodel]"
    out_dtype = image_tokens.dtype
    M = B * S

    # bf16 MXU operands by default for fp32 inputs; fp32 accumulation either way.
    if compute_dtype == "auto":
        compute_dtype = jnp.bfloat16 if image_tokens.dtype == jnp.float32 else image_tokens.dtype

    x2d = image_tokens.reshape(M, D).astype(compute_dtype)
    # Pre-transpose the weight once to [D, P] -> canonical (m,k)x(k,n) MXU feed.
    # weight is a static module parameter, so under jit this transpose/cast is
    # amortized / constant-folded (callers may also cache weight.T themselves).
    wt = weight.T.astype(compute_dtype)
    b2d = bias.reshape(1, P)

    in_itemsize = jnp.dtype(compute_dtype).itemsize
    out_itemsize = jnp.dtype(out_dtype).itemsize
    bias_bytes = jnp.dtype(bias.dtype).itemsize

    # ---------------- single-block fast path (tiny problems, e.g. D=32, P=64) ----------
    total_bytes = ((M * D + D * P) * in_itemsize
                   + M * P * (out_itemsize + 4)          # output + fp32 intermediate
                   + P * bias_bytes)
    if single_block is None:
        single_block = total_bytes <= (8 << 20)
    if single_block:
        # No grid: whole arrays live in VMEM, block dims equal full array dims
        # (satisfies the (8,128) rule without any padding), no scratch, no pl.when.
        out2d = pl.pallas_call(
            _proj_kernel_single,
            out_shape=jax.ShapeDtypeStruct((M, P), out_dtype),
        )(x2d, wt, b2d)
        return out2d.reshape(B, S, P)

    # ---------------- tiled (M, N, K) path ----------------------------------------------
    row_align = 8 if in_itemsize >= 4 else 16
    tm_auto = tm is None
    if tm is None:
        tm = min(512, _round_up(M, row_align))
    if tn is None:
        tn = min(512, _round_up(P, 128))
    if tk is None:
        # Prefer a full-K tile (collapses the K grid axis, removes the accumulator);
        # budget ~24 MiB so the double-buffered footprint stays v7x-safe (64 MiB VMEM/TC).
        budget = 24 << 20
        tk = _round_up(D, 128)
        while tk > 512 and (2 * (tm * tk + tk * tn) * in_itemsize
                            + 2 * tm * tn * out_itemsize + tm * tn * 4) > budget:
            tk = _round_up(tk // 2, 128)
    Dp = _round_up(D, tk)

    # Give v7x's two TensorCores at least 2 parallel (i,j) blocks (only when tm is auto).
    if tm_auto:
        while pl.cdiv(M, tm) * pl.cdiv(P, tn) < 2 and tm > row_align:
            tm = max(row_align, _round_up(tm // 2, row_align))

    # Clamp tiles to the (aligned) problem size; pad M/P only in the corner case where a
    # single aligned tile would exceed the array (partial remainder blocks are handled by
    # the cdiv grid + masked stores, so no M/P padding in the common case).
    Mp_min, Pp_min = _round_up(M, row_align), _round_up(P, 128)
    tm, tn = min(tm, Mp_min), min(tn, Pp_min)
    pad_m = (Mp_min - M) if tm > M else 0
    pad_p = (Pp_min - P) if tn > P else 0
    Mo, Po = M + pad_m, P + pad_p

    # Zero-pad K (correctness) and the rare tiny-M / tiny-P corner case.
    if pad_m or Dp != D:
        x2d = jnp.pad(x2d, ((0, pad_m), (0, Dp - D)))
    if pad_p or Dp != D:
        wt = jnp.pad(wt, ((0, Dp - D), (0, pad_p)))
    if pad_p:
        b2d = jnp.pad(b2d, ((0, 0), (0, pad_p)))

    n_i, n_j, n_k = pl.cdiv(Mo, tm), pl.cdiv(Po, tn), Dp // tk
    grid = (n_i, n_j, n_k)

    if n_k == 1:
        kernel = _proj_kernel_fullk
        scratch = []
    else:
        kernel = _proj_kernel_ksplit
        scratch = [pltpu.VMEM((tm, tn), jnp.float32)]

    # VMEM footprint: double-buffered x/w/out tiles (+ acc + bias); limit ~1.5x that.
    est = (2 * (tm * tk + tk * tn) * in_itemsize
           + 2 * tm * tn * out_itemsize
           + (tm * tn * 4 if n_k > 1 else 0)
           + 2 * tn * bias_bytes)
    vmem_limit = int(min(max(3 * est // 2, 16 << 20), 64 << 20))

    # Advisory cost: includes the x / w HBM re-read factors (x refetched per N tile,
    # w refetched per M tile).
    cost = pl.CostEstimate(
        flops=2 * M * D * P,
        transcendentals=0,
        bytes_accessed=int((M * Dp * n_j + Dp * P * n_i) * in_itemsize
                           + M * P * out_itemsize + P * bias_bytes),
    )

    out2d = pl.pallas_call(
        kernel,
        out_shape=jax.ShapeDtypeStruct((Mo, Po), out_dtype),
        grid_spec=pltpu.PrefetchScalarGridSpec(
            num_scalar_prefetch=0,
            grid=grid,
            in_specs=[
                pl.BlockSpec((tm, tk), lambda i, j, k: (i, k)),   # x tile
                pl.BlockSpec((tk, tn), lambda i, j, k: (k, j)),   # weight tile ([D,P])
                pl.BlockSpec((1, tn), lambda i, j, k: (0, j)),    # bias tile
            ],
            out_specs=pl.BlockSpec((tm, tn), lambda i, j, k: (i, j)),
            scratch_shapes=scratch,
        ),
        compiler_params=pltpu.CompilerParams(
            dimension_semantics=("parallel", "parallel", "arbitrary"),
            vmem_limit_bytes=vmem_limit,
        ),
        cost_estimate=cost,
    )(x2d, wt, b2d)

    if pad_m or pad_p:
        out2d = out2d[:M, :P]
    return out2d.reshape(B, S, P)


# ---------------------------------------------------------------------------
# Self-test
# ---------------------------------------------------------------------------
if __name__ == "__main__":
    key = jax.random.PRNGKey(0)
    k_x, k_w, k_b, k_x2, k_w2, k_b2 = jax.random.split(key, 6)

    # --- 1) Nominal module shapes (dmodel=32, projection_dim=64): single-block fast path.
    B, S, D, P = 2, 8, 32, 64
    x = jax.random.normal(k_x, (B, S, D), dtype=jnp.float32)
    w = jax.random.normal(k_w, (P, D), dtype=jnp.float32) * 0.02   # nn.Linear [P, D]
    b = jax.random.normal(k_b, (P,), dtype=jnp.float32) * 0.01
    ref = jnp.einsum("bsd,pd->bsp", x, w) + b

    out_fp32 = jax.block_until_ready(image_projection(x, w, b, compute_dtype=jnp.float32))
    assert out_fp32.shape == (B, S, P)
    assert jnp.allclose(out_fp32, ref, atol=1e-5, rtol=1e-5), "fp32 fast-path mismatch"

    out_auto = jax.block_until_ready(image_projection(x, w, b))   # default bf16 MXU operands
    ref_bf = (jnp.einsum("bsd,pd->bsp",
                         x.astype(jnp.bfloat16).astype(jnp.float32),
                         w.astype(jnp.bfloat16).astype(jnp.float32)) + b)
    assert jnp.allclose(out_auto, ref_bf, atol=2e-2, rtol=2e-2), "bf16 fast-path mismatch"

    # --- 2) Tiled path: non-divisible M/P, K padded 160->256, full-K (no accumulator).
    B2, S2, D2, P2 = 2, 100, 160, 192
    x2 = jax.random.normal(k_x2, (B2, S2, D2), dtype=jnp.float32)
    w2 = jax.random.normal(k_w2, (P2, D2), dtype=jnp.float32) * 0.02
    b2 = jax.random.normal(k_b2, (P2,), dtype=jnp.float32) * 0.01
    ref2 = jnp.einsum("bsd,pd->bsp", x2, w2) + b2

    out2 = jax.block_until_ready(
        image_projection(x2, w2, b2, compute_dtype=jnp.float32,
                         tm=64, tn=128, single_block=False))
    assert jnp.allclose(out2, ref2, atol=1e-4, rtol=1e-4), "tiled full-K mismatch"

    # --- 3) Same shapes with an explicit K split (tk=128 -> 2 K steps, scratch accumulator).
    out3 = jax.block_until_ready(
        image_projection(x2, w2, b2, compute_dtype=jnp.float32,
                         tm=64, tn=128, tk=128, single_block=False))
    assert jnp.allclose(out3, ref2, atol=1e-4, rtol=1e-4), "tiled K-split mismatch"

    print("KERNEL_OK")
</pallas_src>

<mosaic_0001>
module attributes {stable_mosaic.version = 11 : i64} {
  func.func @_proj_kernel_fullk(%arg0: memref<16x32xf32, #tpu.memory_space<vmem>>, %arg1: memref<32x64xf32, #tpu.memory_space<vmem>>, %arg2: memref<1x64xf32, #tpu.memory_space<vmem>>, %arg3: memref<16x64xf32, #tpu.memory_space<vmem>>) attributes {dimension_semantics = [], scalar_prefetch = 0 : i64, scratch_operands = 0 : i64, tpu.core_type = #tpu.core_type<tc>} {
    %c0 = arith.constant 0 : index
    %c0_0 = arith.constant 0 : index
    %0 = vector.load %arg0[%c0, %c0_0] : memref<16x32xf32, #tpu.memory_space<vmem>>, vector<16x32xf32>
    %c0_1 = arith.constant 0 : index
    %c0_2 = arith.constant 0 : index
    %1 = vector.load %arg1[%c0_1, %c0_2] : memref<32x64xf32, #tpu.memory_space<vmem>>, vector<32x64xf32>
    %cst = arith.constant dense<0.000000e+00> : vector<16x64xf32>
    %2 = tpu.matmul %0, %1, %cst {dimension_numbers = #tpu.dot_dimension_numbers<[1], [0], [0], [1], [0, 0, 1, 1], [], []>} : vector<16x32xf32>, vector<32x64xf32>, vector<16x64xf32> -> vector<16x64xf32>
    %c0_3 = arith.constant 0 : index
    %c0_4 = arith.constant 0 : index
    %3 = vector.load %arg2[%c0_3, %c0_4] : memref<1x64xf32, #tpu.memory_space<vmem>>, vector<1x64xf32>
    %4 = vector.broadcast %3 : vector<1x64xf32> to vector<16x64xf32>
    %5 = arith.addf %2, %4 : vector<16x64xf32>
    %c0_5 = arith.constant 0 : index
    %c0_6 = arith.constant 0 : index
    %6 = vector.load %arg3[%c0_5, %c0_6] : memref<16x64xf32, #tpu.memory_space<vmem>>, vector<16x64xf32>
    tpu.vector_store %arg3[%c0_5, %c0_6], %5 {strides = array<i32>} : memref<16x64xf32, #tpu.memory_space<vmem>>, vector<16x64xf32>,
    return
  }
}

</mosaic_0001>

<llo_original>
// kernel: tpu_custom_call.1
$region0: #{tpu_custom_call.1}
  #allocation0 [shape = 'u32[]', space=smem, size = 0x4, offset = 0x4, fixed_abs, tag = 'smem constant byte address 0x4 - core index']
  #allocation1 [shape = 'u32[144,128]{1,0:T(1,128)}', space=vmem, size = 0x12000, scoped, tag = 'internal scratch']
  %s0 = inlined_call_operand.hbm [shape: f32[16,32], index: 0, kind: input, shape index: {}]
  %s1 = inlined_call_operand.hbm [shape: f32[32,64], index: 1, kind: input, shape index: {}]
  %s2 = inlined_call_operand.vmem [shape: f32[1,64], index: 2, kind: input, shape index: {}]
  %s3 = inlined_call_operand.hbm [shape: f32[16,64], index: 3, kind: output, shape index: {}]
  %s4 = sld [smem:[#allocation0]]
  $region30: #{tpu_custom_call.1} parent=0
    _
  %s6 = ssub.s32 1, %s4
  %s7 = scalar_select 0, %s6, %s4
  $region1: #{tpu_custom_call.1} parent=0
    #allocation2 [shape = 'u8[8192]{0}', space=vmem, size = 0x2000, scoped, tag = 'input window, operand 0, single buffered']
    #allocation3 [shape = 's32[1]{0}', space=sflag, size = 0x4, scoped, tag = 'scoped memory for tpu_custom_call.1']
    #allocation4 [shape = 's32[1]{0}', space=sflag, size = 0x4, scoped, tag = 'scoped memory for tpu_custom_call.1']
    #allocation5 [shape = 'u8[16384]{0}', space=vmem, size = 0x4000, scoped, tag = 'input window, operand 1, single buffered']
    #allocation6 [shape = 's32[1]{0}', space=sflag, size = 0x4, scoped, tag = 'scoped memory for tpu_custom_call.1']
    #allocation7 [shape = 'u8[8192]{0}', space=vmem, size = 0x2000, scoped, tag = 'output window, operand 0, single buffered']
    %8 = vsyncpa [#allocation3], 0
    %9 = vsyncpa [#allocation6], 0
    %10 = vsyncpa [#allocation4], 0
    // Predicated region
    $region2: #{tpu_custom_call.1} parent=1 // pred_check
      _
    $region3: #{tpu_custom_call.1} parent=1 // pred_check_branch
      %12 = sbr.rel (0) target = $region5
    $region4: #{tpu_custom_call.1} parent=1 // pred_region
      %s14 = ssub.s32 256, 256
      %15 = vsyncadd [#allocation3], %s14
      %s16 = sshll.u32 [#allocation2], 4
      %s17 = int_to_ptr.vmem [resolvable:$true] %s16
      %22 = dma.hbm_to_vmem [thread:$0]  %s0, 256, %s17, [#allocation3], 128, 128, 8
    $region5: #{tpu_custom_call.1} parent=1 // pred_fallthru
      _
    // Predicated region
    $region6: #{tpu_custom_call.1} parent=1 // pred_check
      _
    $region7: #{tpu_custom_call.1} parent=1 // pred_check_branch
      %24 = sbr.rel (0) target = $region9
    $region8: #{tpu_custom_call.1} parent=1 // pred_region
      %s26 = ssub.s32 512, 512
      %27 = vsyncadd [#allocation6], %s26
      %s28 = sshll.u32 [#allocation5], 4
      %s29 = int_to_ptr.vmem [resolvable:$true] %s28
      %34 = dma.hbm_to_vmem [thread:$0]  %s1, 512, %s29, [#allocation6], 128, 128, 8
    $region9: #{tpu_custom_call.1} parent=1 // pred_fallthru
      _
    // Predicated region
    $region10: #{tpu_custom_call.1} parent=1 // pred_check
      _
    $region11: #{tpu_custom_call.1} parent=1 // pred_check_branch
      %36 = sbr.rel (0) target = $region13
    $region12: #{tpu_custom_call.1} parent=1 // pred_region
      _
    $region13: #{tpu_custom_call.1} parent=1 // pred_fallthru
      _
    // Predicated region
    $region14: #{tpu_custom_call.1} parent=1 // pred_check
      _
    $region15: #{tpu_custom_call.1} parent=1 // pred_check_branch
      %38 = sbr.rel (0) target = $region17
    $region16: #{tpu_custom_call.1} parent=1 // pred_region
      %39 = dma.done [#allocation3], 256
    $region17: #{tpu_custom_call.1} parent=1 // pred_fallthru
      _
    // Predicated region
    $region18: #{tpu_custom_call.1} parent=1 // pred_check
      _
    $region19: #{tpu_custom_call.1} parent=1 // pred_check_branch
      %41 = sbr.rel (0) target = $region21
    $region20: #{tpu_custom_call.1} parent=1 // pred_region
      %42 = dma.done [#allocation6], 512
    $region21: #{tpu_custom_call.1} parent=1 // pred_fallthru
      _
    %v43 = vld [vmem:[#allocation2] sm:$0xff]
    %v44 = vld [vmem:[#allocation2 + $0x8] sm:$0xff]
    %v45 = vld [vmem:[#allocation5] sm:$0xff]
    %v46 = vld [vmem:[#allocation5 + $0x8] sm:$0xff]
    %v47 = vld [vmem:[#allocation5 + $0x10] sm:$0xff]
    %v48 = vld [vmem:[#allocation5 + $0x18] sm:$0xff]
    %v49 = vld [vmem:[%s2] sm:$0x1]
    %v51 = vlaneseq
    %v52 = vshrl.u32 %v51, 7
    %v53 = vsub.s32 0, %v52
    %v54 = vrot.slane %v49, %v53
    %vm56 = vcmask 261120
    %v58 = vsel %vm56, %v43, 0
    %v61 = vsel %vm56, %v44, 0
    %63 = vmatprep.subr.mxu0 0.0
    %64 = vmatpush1.msra.mxu0 0.0
    %65 = vmatprep.subr.mxu0 0.0
    %66 = vmatpush1.msra.mxu0 0.0
    %67 = vmatprep.subr.mxu0 0.0
    %68 = vmatpush1.msra.mxu0 0.0
    %69 = vmatprep.subr.mxu0 0.0
    %70 = vmatpush1.msra.mxu0 0.0
    %71 = vmatprep.subr.mxu0 0.0
    %72 = vmatpush1.msra.mxu0 0.0
    %73 = vmatprep.subr.mxu0 0.0
    %74 = vmatpush1.msra.mxu0 0.0
    %75 = vmatprep.subr.mxu0 0.0
    %76 = vmatpush1.msra.mxu0 0.0
    %77 = vmatprep.subr.mxu0 0.0
    %78 = vmatpush1.msra.mxu0 0.0
    %79 = vmatprep.subr.mxu0 0.0
    %80 = vmatpush1.msra.mxu0 0.0
    %81 = vmatprep.subr.mxu0 0.0
    %82 = vmatpush1.msra.mxu0 0.0
    %83 = vmatprep.subr.mxu0 0.0
    %84 = vmatpush1.msra.mxu0 0.0
    %85 = vmatprep.subr.mxu0 0.0
    %86 = vmatpush1.msra.mxu0 0.0
    %87 = vmatprep.subr.mxu0 0.0
    %88 = vmatpush1.msra.mxu0 %v48
    %89 = vmatprep.subr.mxu0 0.0
    %90 = vmatpush1.msra.mxu0 %v47
    %91 = vmatprep.subr.mxu0 0.0
    %92 = vmatpush1.msra.mxu0 %v46
    %93 = vmatprep.subr.mxu0 0.0
    %94 = vmatpush1.msra.mxu0 %v45
    %95 = vmatprep.subr.mxu0 0.0
    %96 = vmatpush2.msra.mxu0 0.0
    %97 = vmatprep.subr.mxu0 0.0
    %98 = vmatpush2.msra.mxu0 0.0
    %99 = vmatprep.subr.mxu0 0.0
    %100 = vmatpush2.msra.mxu0 0.0
    %101 = vmatprep.subr.mxu0 0.0
    %102 = vmatpush2.msra.mxu0 0.0
    %103 = vmatprep.subr.mxu0 0.0
    %104 = vmatpush2.msra.mxu0 0.0
    %105 = vmatprep.subr.mxu0 0.0
    %106 = vmatpush2.msra.mxu0 0.0
    %107 = vmatprep.subr.mxu0 0.0
    %108 = vmatpush2.msra.mxu0 0.0
    %109 = vmatprep.subr.mxu0 0.0
    %110 = vmatpush2.msra.mxu0 0.0
    %111 = vmatprep.subr.mxu0 0.0
    %112 = vmatpush2.msra.mxu0 0.0
    %113 = vmatprep.subr.mxu0 0.0
    %114 = vmatpush2.msra.mxu0 0.0
    %115 = vmatprep.subr.mxu0 0.0
    %116 = vmatpush2.msra.mxu0 0.0
    %117 = vmatprep.subr.mxu0 0.0
    %118 = vmatpush2.msra.mxu0 0.0
    %119 = vmatprep.subr.mxu0 0.0
    %120 = vmatpush2.msra.mxu0 0.0
    %121 = vmatprep.subr.mxu0 0.0
    %122 = vmatpush2.msra.mxu0 0.0
    %123 = vmatprep.subr.mxu0 0.0
    %124 = vmatpush2.msra.mxu0 0.0
    %125 = vmatprep.subr.mxu0 0.0
    %126 = vmatpush2.msra.mxu0 0.0
    %127 = vmatprep.mubr.f32.mxu0 0.0
    %128 = vmatmul.mubr.f32.gmra.mxu0 %v58
    %v129 = vpop.f32.mrf.mxu0
    %v130 = vadd.f32 %v54, %v129
    %v131 = vpop.f32.mrf.mxu0
    %132 = vmatprep.mubr.f32.mxu0 0.0
    %133 = vmatmul.mubr.f32.gmra.mxu0 %v61
    %v134 = vpop.f32.mrf.mxu0
    %v135 = vadd.f32 %v54, %v134
    %v136 = vpop.f32.mrf.mxu0
    %137 = vdwg.mxu0
    %vm138 = vcmask 523264
    %139 = vst.msk [vmem:[#allocation7] sm:$0xff] %vm138, %v130
    %140 = vst.msk [vmem:[#allocation7 + $0x8] sm:$0xff] %vm138, %v135
    // Predicated region
    $region22: #{tpu_custom_call.1} parent=1 // pred_check
      _
    $region23: #{tpu_custom_call.1} parent=1 // pred_check_branch
      %142 = sbr.rel (0) target = $region25
    $region24: #{tpu_custom_call.1} parent=1 // pred_region
      %s144 = ssub.s32 256, 256
      %145 = vsyncadd [#allocation4], %s144
      %s146 = sshll.u32 [#allocation7], 4
      %s147 = int_to_ptr.vmem [resolvable:$true] %s146
      %152 = dma.vmem_to_hbm [thread:$0]  %s147, 256, %s3, [#allocation4], 128, 128, 8
    $region25: #{tpu_custom_call.1} parent=1 // pred_fallthru
      _
    // Predicated region
    $region26: #{tpu_custom_call.1} parent=1 // pred_check
      _
    $region27: #{tpu_custom_call.1} parent=1 // pred_check_branch
      %154 = sbr.rel (0) target = $region29
    $region28: #{tpu_custom_call.1} parent=1 // pred_region
      %155 = dma.done [#allocation4], 256
    $region29: #{tpu_custom_call.1} parent=1 // pred_fallthru
      _
    %156 = vsyncpa [#allocation3], 1
    %157 = vsyncpa [#allocation6], 1
    %158 = vsyncpa [#allocation4], 1

</llo_original>
